<compile_context>
chip_gen: v7x
topology: tpu7x:2x2x1
jax: 0.10.0
libtpu: 0.0.40
codegen_flags: <defaults>
</compile_context>

<pallas_src>
import functools

import jax
import jax.numpy as jnp
from jax.experimental import pallas as pl
from jax.experimental.pallas import tpu as pltpu  # noqa: F401  (TPU backend)


# ----------------------------------------------------------------------------
# Helpers
# ----------------------------------------------------------------------------
def _round_up(n, m):
    return ((n + m - 1) // m) * m


def _full_spec(shape):
    # Single grid point -> whole-array block.  Full-array blocks are exempt from
    # the (8,128) divisibility rule, so true (unpadded) K / hidden widths are fine.
    return pl.BlockSpec(shape, lambda: tuple(0 for _ in shape))


# ----------------------------------------------------------------------------
# Fused kernel: the entire MLP in one pallas_call
# ----------------------------------------------------------------------------
def _fused_mlp_kernel(*refs, num_hidden, true_b, eps):
    """refs = (x, vec_stack, w_0, ..., w_{L}, out).

    vec_stack rows: [b_0, gamma_0, beta_0, ..., b_{L-1}, gamma_{L-1}, beta_{L-1}, b_L]
    """
    x_ref, vec_ref = refs[0], refs[1]
    o_ref = refs[-1]
    w_refs = refs[2:-1]

    h = x_ref[...].astype(jnp.float32)          # [Bp, K0]  (VMEM resident)
    padded_b = h.shape[0]

    # Hoisted row mask for BN statistics when the batch had to be padded to 8.
    masked = true_b != padded_b
    if masked:
        row_ok = (
            jax.lax.broadcasted_iota(jnp.int32, (padded_b, 1), 0) < true_b
        ).astype(jnp.float32)
        inv_n = 1.0 / float(true_b)

    for i in range(num_hidden):
        w = w_refs[i][...]                       # [K, H]  (true hidden width)
        hdim = w.shape[1]
        b = vec_ref[3 * i: 3 * i + 1, :hdim]     # [1, H]
        gamma = vec_ref[3 * i + 1: 3 * i + 2, :hdim]
        beta = vec_ref[3 * i + 2: 3 * i + 3, :hdim]

        z = jnp.dot(h, w, preferred_element_type=jnp.float32) + b    # [Bp, H]

        # BatchNorm1d, training mode, biased variance -- two-pass (stable) form.
        if masked:
            mean = jnp.sum(z * row_ok, axis=0, keepdims=True) * inv_n
            zc = z - mean
            var = jnp.sum(zc * zc * row_ok, axis=0, keepdims=True) * inv_n
        else:
            mean = jnp.mean(z, axis=0, keepdims=True)
            zc = z - mean
            var = jnp.mean(zc * zc, axis=0, keepdims=True)

        # Folded affine: y = zc * (gamma * inv_std) + beta   (row work is [1, H])
        scale = gamma * jax.lax.rsqrt(var + eps)
        y = zc * scale + beta

        # Swish(y) = y * sigmoid(y)   (sigmoid -> EUP slot, essentially free)
        h = y * jax.nn.sigmoid(y)

    # Final Linear (output width padded to a 128 multiple -> lane-dense store).
    w = w_refs[num_hidden][...]                  # [K, Nout_p]
    nout = w.shape[1]
    b_last = vec_ref[3 * num_hidden: 3 * num_hidden + 1, :nout]
    out = jnp.dot(h, w, preferred_element_type=jnp.float32) + b_last

    o_ref[...] = out[:true_b].astype(o_ref.dtype)


# ----------------------------------------------------------------------------
# Parameter init (mimics nn.Linear's U(-1/sqrt(fan_in), 1/sqrt(fan_in)))
# ----------------------------------------------------------------------------
def init_adv_params(key, input_dim=64, output_dim=10, hidden_dim=64, hidden_layers=0):
    params = []
    prev = input_dim
    for i in range(hidden_layers + 1):
        out = output_dim if i == hidden_layers else hidden_dim
        key, kw, kb = jax.random.split(key, 3)
        bound = 1.0 / jnp.sqrt(prev)
        w = jax.random.uniform(kw, (prev, out), jnp.float32, -bound, bound)
        b = jax.random.uniform(kb, (1, out), jnp.float32, -bound, bound)
        layer = {"w": w, "b": b}
        if i != hidden_layers:
            layer["gamma"] = jnp.ones((1, out), jnp.float32)
            layer["beta"] = jnp.zeros((1, out), jnp.float32)
        params.append(layer)
        prev = out
    return params


# ----------------------------------------------------------------------------
# One-time parameter preparation: pad / stack everything once at init.
# ----------------------------------------------------------------------------
def prepare_adv_params(params):
    num_hidden = len(params) - 1

    din = params[0]["w"].shape[0]
    din_p = _round_up(din, 8)                      # K only needs the sublane x8
    out_dim = params[-1]["w"].shape[1]
    nout_p = _round_up(out_dim, 128)               # lane-dense final store

    # Common width for the stacked (1, N) vectors.
    widths = [p["w"].shape[1] for p in params[:-1]] + [nout_p]
    vp = max(widths)

    weights = []
    vec_rows = []
    for i, p in enumerate(params):
        k, n = p["w"].shape
        k_p = din_p if i == 0 else k               # hidden K already matches prev H
        n_p = nout_p if i == num_hidden else n     # hidden widths stay at true size
        w_p = jnp.pad(p["w"].astype(jnp.float32), ((0, k_p - k), (0, n_p - n)))
        weights.append(w_p)

        def _row(v):
            v = v.astype(jnp.float32).reshape(1, -1)
            return jnp.pad(v, ((0, 0), (0, vp - v.shape[1])))

        vec_rows.append(_row(p["b"]))
        if i != num_hidden:
            vec_rows.append(_row(p["gamma"]))
            vec_rows.append(_row(p["beta"]))

    vec = jnp.concatenate(vec_rows, axis=0)        # [3*L + 1, Vp]

    return {
        "weights": weights,
        "vec": vec,
        "num_hidden": num_hidden,
        "din": din,
        "din_p": din_p,
        "out_dim": out_dim,
        "nout_p": nout_p,
    }


# ----------------------------------------------------------------------------
# Forward: (optional) x pad -> single fused pallas_call -> lane slice
# ----------------------------------------------------------------------------
def adv_forward(prepared, x, eps=1e-5):
    B, din = x.shape
    assert din == prepared["din"]
    num_hidden = prepared["num_hidden"]
    din_p = prepared["din_p"]
    out_dim = prepared["out_dim"]
    nout_p = prepared["nout_p"]

    Bp = _round_up(B, 8)
    if Bp != B or din_p != din:
        x_p = jnp.pad(x, ((0, Bp - B), (0, din_p - din)))
    else:
        x_p = x

    weights = prepared["weights"]
    vec = prepared["vec"]

    flat_inputs = [x_p, vec] + list(weights)
    in_specs = [_full_spec(x_p.shape), _full_spec(vec.shape)] + [
        _full_spec(w.shape) for w in weights
    ]

    flops = sum(2 * Bp * w.shape[0] * w.shape[1] for w in weights)
    transcendentals = sum(Bp * w.shape[1] for w in weights[:num_hidden])  # sigmoid
    bytes_accessed = sum(int(a.size) * 4 for a in flat_inputs) + B * nout_p * 4

    kernel = functools.partial(
        _fused_mlp_kernel, num_hidden=num_hidden, true_b=B, eps=eps
    )

    out_p = pl.pallas_call(
        kernel,
        out_shape=jax.ShapeDtypeStruct((B, nout_p), x.dtype),
        grid=(),
        in_specs=in_specs,
        out_specs=_full_spec((B, nout_p)),
        cost_estimate=pl.CostEstimate(
            flops=flops,
            transcendentals=transcendentals,
            bytes_accessed=bytes_accessed,
        ),
    )(*flat_inputs)

    out = out_p[:, :out_dim]
    if out_dim == 1:
        out = jnp.squeeze(out)
    return out


# ----------------------------------------------------------------------------
# Plain-JAX reference (matches the PyTorch module in training mode)
# ----------------------------------------------------------------------------
def _reference_forward(params, x, output_dim, eps=1e-5):
    h = x
    for i, p in enumerate(params):
        h = h @ p["w"] + p["b"]
        if i < len(params) - 1:
            mean = jnp.mean(h, axis=0, keepdims=True)
            var = jnp.mean((h - mean) ** 2, axis=0, keepdims=True)
            y = p["gamma"] * (h - mean) / jnp.sqrt(var + eps) + p["beta"]
            h = y * jax.nn.sigmoid(y)
    if output_dim == 1:
        h = jnp.squeeze(h)
    return h


# ----------------------------------------------------------------------------
if __name__ == "__main__":
    key = jax.random.PRNGKey(0)
    input_dim, hidden_dim = 64, 64
    k1, k2, k3, kx1, kx2, kx3 = jax.random.split(key, 6)

    # Config 0: default Adv (hidden_layers=0) -> single fused Linear.
    B0, out0_dim = 8, 10
    x0 = jax.random.normal(kx1, (B0, input_dim), jnp.float32)
    p0 = init_adv_params(k1, input_dim, out0_dim, hidden_dim, hidden_layers=0)
    prep0 = prepare_adv_params(p0)          # one-time pad/stack (not per call)
    y0 = adv_forward(prep0, x0)
    jax.block_until_ready(y0)
    assert y0.shape == (B0, out0_dim)
    ref0 = _reference_forward(p0, x0, out0_dim)
    assert jnp.allclose(y0, ref0, atol=1e-5, rtol=1e-5), "config0 mismatch"

    # Config 1: hidden_layers=2 -> two Linear+BN+Swish blocks + final Linear,
    # all fused into ONE pallas_call.
    B1, out1_dim = 8, 10
    x1 = jax.random.normal(kx2, (B1, input_dim), jnp.float32)
    p1 = init_adv_params(k2, input_dim, out1_dim, hidden_dim, hidden_layers=2)
    prep1 = prepare_adv_params(p1)
    y1 = adv_forward(prep1, x1)
    jax.block_until_ready(y1)
    assert y1.shape == (B1, out1_dim)
    ref1 = _reference_forward(p1, x1, out1_dim)
    assert jnp.allclose(y1, ref1, atol=1e-4, rtol=1e-4), "config1 mismatch"

    # Config 2: non-multiple-of-8 batch (exercises the hoisted masked BN stats)
    # and output_dim=1 (exercises the squeeze path).
    B2, out2_dim = 12, 1
    x2 = jax.random.normal(kx3, (B2, input_dim), jnp.float32)
    p2 = init_adv_params(k3, input_dim, out2_dim, hidden_dim, hidden_layers=1)
    prep2 = prepare_adv_params(p2)
    y2 = adv_forward(prep2, x2)
    jax.block_until_ready(y2)
    assert y2.shape == (B2,)
    ref2 = _reference_forward(p2, x2, out2_dim)
    assert jnp.allclose(y2, ref2, atol=1e-4, rtol=1e-4), "config2 mismatch"

    print("KERNEL_OK")
</pallas_src>

<mosaic_0001>
module attributes {stable_mosaic.version = 11 : i64} {
  func.func @_fused_mlp_kernel(%arg0: memref<8x64xf32, #tpu.memory_space<vmem>>, %arg1: memref<1x128xf32, #tpu.memory_space<vmem>>, %arg2: memref<64x128xf32, #tpu.memory_space<vmem>>, %arg3: memref<8x128xf32, #tpu.memory_space<vmem>>) attributes {dimension_semantics = [], scalar_prefetch = 0 : i64, scratch_operands = 0 : i64, tpu.core_type = #tpu.core_type<tc>} {
    %c0 = arith.constant 0 : index
    %c0_0 = arith.constant 0 : index
    %0 = vector.load %arg0[%c0, %c0_0] : memref<8x64xf32, #tpu.memory_space<vmem>>, vector<8x64xf32>
    %c0_1 = arith.constant 0 : index
    %c0_2 = arith.constant 0 : index
    %1 = vector.load %arg2[%c0_1, %c0_2] : memref<64x128xf32, #tpu.memory_space<vmem>>, vector<64x128xf32>
    %c0_3 = arith.constant 0 : index
    %c0_4 = arith.constant 0 : index
    %2 = vector.load %arg1[%c0_3, %c0_4] : memref<1x128xf32, #tpu.memory_space<vmem>>, vector<1x128xf32>
    %cst = arith.constant dense<0.000000e+00> : vector<8x128xf32>
    %3 = tpu.matmul %0, %1, %cst {dimension_numbers = #tpu.dot_dimension_numbers<[1], [0], [0], [1], [0, 0, 1, 1], [], []>} : vector<8x64xf32>, vector<64x128xf32>, vector<8x128xf32> -> vector<8x128xf32>
    %4 = vector.broadcast %2 : vector<1x128xf32> to vector<8x128xf32>
    %5 = arith.addf %3, %4 : vector<8x128xf32>
    %c0_5 = arith.constant 0 : index
    %c0_6 = arith.constant 0 : index
    %6 = vector.load %arg3[%c0_5, %c0_6] : memref<8x128xf32, #tpu.memory_space<vmem>>, vector<8x128xf32>
    tpu.vector_store %arg3[%c0_5, %c0_6], %5 {strides = array<i32>} : memref<8x128xf32, #tpu.memory_space<vmem>>, vector<8x128xf32>,
    return
  }
}

</mosaic_0001>

<llo_original>
// kernel: tpu_custom_call.1
$region0: #{tpu_custom_call.1}
  #allocation0 [shape = 'u32[]', space=smem, size = 0x4, offset = 0x4, fixed_abs, tag = 'smem constant byte address 0x4 - core index']
  #allocation1 [shape = 'u32[144,128]{1,0:T(1,128)}', space=vmem, size = 0x12000, scoped, tag = 'internal scratch']
  %s0 = inlined_call_operand.hbm [shape: f32[8,64], index: 0, kind: input, shape index: {}]
  %s1 = inlined_call_operand.vmem [shape: f32[1,128], index: 1, kind: input, shape index: {}]
  %s2 = inlined_call_operand.hbm [shape: f32[64,128], index: 2, kind: input, shape index: {}]
  %s3 = inlined_call_operand.hbm [shape: f32[8,128], index: 3, kind: output, shape index: {}]
  %s4 = sld [smem:[#allocation0]]
  $region30: #{tpu_custom_call.1} parent=0
    _
  %s6 = ssub.s32 1, %s4
  %s7 = scalar_select 0, %s6, %s4
  $region1: #{tpu_custom_call.1} parent=0
    #allocation2 [shape = 'u8[4096]{0}', space=vmem, size = 0x1000, scoped, tag = 'input window, operand 0, single buffered']
    #allocation3 [shape = 's32[1]{0}', space=sflag, size = 0x4, scoped, tag = 'scoped memory for tpu_custom_call.1']
    #allocation4 [shape = 's32[1]{0}', space=sflag, size = 0x4, scoped, tag = 'scoped memory for tpu_custom_call.1']
    #allocation5 [shape = 'u8[32768]{0}', space=vmem, size = 0x8000, scoped, tag = 'input window, operand 2, single buffered']
    #allocation6 [shape = 's32[1]{0}', space=sflag, size = 0x4, scoped, tag = 'scoped memory for tpu_custom_call.1']
    #allocation7 [shape = 'u8[4096]{0}', space=vmem, size = 0x1000, scoped, tag = 'output window, operand 0, single buffered']
    %8 = vsyncpa [#allocation3], 0
    %9 = vsyncpa [#allocation6], 0
    %10 = vsyncpa [#allocation4], 0
    // Predicated region
    $region2: #{tpu_custom_call.1} parent=1 // pred_check
      _
    $region3: #{tpu_custom_call.1} parent=1 // pred_check_branch
      %12 = sbr.rel (0) target = $region5
    $region4: #{tpu_custom_call.1} parent=1 // pred_region
      %s14 = ssub.s32 128, 128
      %15 = vsyncadd [#allocation3], %s14
      %s17 = sshll.u32 [#allocation2], 4
      %s18 = int_to_ptr.vmem [resolvable:$true] %s17
      %20 = dma.hbm_to_vmem [thread:$0]  %s0, 128, %s18, [#allocation3]
    $region5: #{tpu_custom_call.1} parent=1 // pred_fallthru
      _
    // Predicated region
    $region6: #{tpu_custom_call.1} parent=1 // pred_check
      _
    $region7: #{tpu_custom_call.1} parent=1 // pred_check_branch
      %22 = sbr.rel (0) target = $region9
    $region8: #{tpu_custom_call.1} parent=1 // pred_region
      _
    $region9: #{tpu_custom_call.1} parent=1 // pred_fallthru
      _
    // Predicated region
    $region10: #{tpu_custom_call.1} parent=1 // pred_check
      _
    $region11: #{tpu_custom_call.1} parent=1 // pred_check_branch
      %24 = sbr.rel (0) target = $region13
    $region12: #{tpu_custom_call.1} parent=1 // pred_region
      %s26 = ssub.s32 1024, 1024
      %27 = vsyncadd [#allocation6], %s26
      %s28 = sshll.u32 [#allocation5], 4
      %s29 = int_to_ptr.vmem [resolvable:$true] %s28
      %34 = dma.hbm_to_vmem [thread:$0]  %s2, 1024, %s29, [#allocation6], 128, 128, 8
    $region13: #{tpu_custom_call.1} parent=1 // pred_fallthru
      _
    // Predicated region
    $region14: #{tpu_custom_call.1} parent=1 // pred_check
      _
    $region15: #{tpu_custom_call.1} parent=1 // pred_check_branch
      %36 = sbr.rel (0) target = $region17
    $region16: #{tpu_custom_call.1} parent=1 // pred_region
      %37 = dma.done [#allocation3], 128
    $region17: #{tpu_custom_call.1} parent=1 // pred_fallthru
      _
    // Predicated region
    $region18: #{tpu_custom_call.1} parent=1 // pred_check
      _
    $region19: #{tpu_custom_call.1} parent=1 // pred_check_branch
      %39 = sbr.rel (0) target = $region21
    $region20: #{tpu_custom_call.1} parent=1 // pred_region
      %40 = dma.done [#allocation6], 1024
    $region21: #{tpu_custom_call.1} parent=1 // pred_fallthru
      _
    %v41 = vld [vmem:[#allocation2] sm:$0xff]
    %v42 = vld [vmem:[#allocation5] sm:$0xff]
    %v43 = vld [vmem:[#allocation5 + $0x8] sm:$0xff]
    %v44 = vld [vmem:[#allocation5 + $0x10] sm:$0xff]
    %v45 = vld [vmem:[#allocation5 + $0x18] sm:$0xff]
    %v46 = vld [vmem:[#allocation5 + $0x20] sm:$0xff]
    %v47 = vld [vmem:[#allocation5 + $0x28] sm:$0xff]
    %v48 = vld [vmem:[#allocation5 + $0x30] sm:$0xff]
    %v49 = vld [vmem:[#allocation5 + $0x38] sm:$0xff]
    %v50 = vld [vmem:[%s1] sm:$0x1]
    %v52 = vlaneseq
    %v53 = vshrl.u32 %v52, 7
    %v54 = vsub.s32 0, %v53
    %v55 = vrot.slane %v50, %v54
    %vm57 = vcmask 523264
    %v59 = vsel %vm57, %v41, 0
    %61 = vmatprep.subr.mxu0 0.0
    %62 = vmatpush1.msra.mxu0 %v42
    %63 = vmatprep.subr.mxu0 0.0
    %64 = vmatpush1.msra.mxu0 %v43
    %65 = vmatprep.subr.mxu0 0.0
    %66 = vmatpush1.msra.mxu0 %v44
    %67 = vmatprep.subr.mxu0 0.0
    %68 = vmatpush1.msra.mxu0 %v45
    %69 = vmatprep.subr.mxu0 0.0
    %70 = vmatpush1.msra.mxu0 %v46
    %71 = vmatprep.subr.mxu0 0.0
    %72 = vmatpush1.msra.mxu0 %v47
    %73 = vmatprep.subr.mxu0 0.0
    %74 = vmatpush1.msra.mxu0 %v48
    %75 = vmatprep.subr.mxu0 0.0
    %76 = vmatpush1.msra.mxu0 %v49
    %77 = vmatprep.subr.mxu0 0.0
    %78 = vmatpush1.msra.mxu0 0.0
    %79 = vmatprep.subr.mxu0 0.0
    %80 = vmatpush1.msra.mxu0 0.0
    %81 = vmatprep.subr.mxu0 0.0
    %82 = vmatpush1.msra.mxu0 0.0
    %83 = vmatprep.subr.mxu0 0.0
    %84 = vmatpush1.msra.mxu0 0.0
    %85 = vmatprep.subr.mxu0 0.0
    %86 = vmatpush1.msra.mxu0 0.0
    %87 = vmatprep.subr.mxu0 0.0
    %88 = vmatpush1.msra.mxu0 0.0
    %89 = vmatprep.subr.mxu0 0.0
    %90 = vmatpush1.msra.mxu0 0.0
    %91 = vmatprep.subr.mxu0 0.0
    %92 = vmatpush1.msra.mxu0 0.0
    %93 = vmatprep.subr.mxu0 0.0
    %94 = vmatpush1.msra.mxu0 0.0
    %95 = vmatprep.subr.mxu0 0.0
    %96 = vmatpush1.msra.mxu0 0.0
    %97 = vmatprep.subr.mxu0 0.0
    %98 = vmatpush1.msra.mxu0 0.0
    %99 = vmatprep.subr.mxu0 0.0
    %100 = vmatpush1.msra.mxu0 0.0
    %101 = vmatprep.subr.mxu0 0.0
    %102 = vmatpush1.msra.mxu0 0.0
    %103 = vmatprep.subr.mxu0 0.0
    %104 = vmatpush1.msra.mxu0 0.0
    %105 = vmatprep.subr.mxu0 0.0
    %106 = vmatpush1.msra.mxu0 0.0
    %107 = vmatprep.subr.mxu0 0.0
    %108 = vmatpush1.msra.mxu0 0.0
    %109 = vmatprep.subr.mxu0 0.0
    %110 = vmatpush1.msra.mxu0 0.0
    %111 = vmatprep.subr.mxu0 0.0
    %112 = vmatpush1.msra.mxu0 0.0
    %113 = vmatprep.subr.mxu0 0.0
    %114 = vmatpush1.msra.mxu0 0.0
    %115 = vmatprep.subr.mxu0 0.0
    %116 = vmatpush1.msra.mxu0 0.0
    %117 = vmatprep.subr.mxu0 0.0
    %118 = vmatpush1.msra.mxu0 0.0
    %119 = vmatprep.subr.mxu0 0.0
    %120 = vmatpush1.msra.mxu0 0.0
    %121 = vmatprep.subr.mxu0 0.0
    %122 = vmatpush1.msra.mxu0 0.0
    %123 = vmatprep.subr.mxu0 0.0
    %124 = vmatpush1.msra.mxu0 0.0
    %125 = vmatprep.mubr.f32.mxu0 0.0
    %126 = vmatmul.mubr.f32.gmra.mrb[0].mxu0 %v59
    %v127 = vpop.f32.mrb[0].mxu0
    %v128 = vadd.f32 %v55, %v127
    %v129 = vpop.f32.mrb[0].mxu0
    %130 = vdwg.mxu0
    %131 = vst [vmem:[#allocation7] sm:$0xff] %v128
    // Predicated region
    $region22: #{tpu_custom_call.1} parent=1 // pred_check
      _
    $region23: #{tpu_custom_call.1} parent=1 // pred_check_branch
      %133 = sbr.rel (0) target = $region25
    $region24: #{tpu_custom_call.1} parent=1 // pred_region
      %s135 = ssub.s32 128, 128
      %136 = vsyncadd [#allocation4], %s135
      %s138 = sshll.u32 [#allocation7], 4
      %s139 = int_to_ptr.vmem [resolvable:$true] %s138
      %141 = dma.vmem_to_hbm [thread:$0]  %s139, 128, %s3, [#allocation4]
    $region25: #{tpu_custom_call.1} parent=1 // pred_fallthru
      _
    // Predicated region
    $region26: #{tpu_custom_call.1} parent=1 // pred_check
      _
    $region27: #{tpu_custom_call.1} parent=1 // pred_check_branch
      %143 = sbr.rel (0) target = $region29
    $region28: #{tpu_custom_call.1} parent=1 // pred_region
      %144 = dma.done [#allocation4], 128
    $region29: #{tpu_custom_call.1} parent=1 // pred_fallthru
      _
    %145 = vsyncpa [#allocation3], 1
    %146 = vsyncpa [#allocation6], 1
    %147 = vsyncpa [#allocation4], 1

</llo_original>
